<compile_context>
chip_gen: v7x
topology: tpu7x:2x2x1
jax: 0.10.0
libtpu: 0.0.40
codegen_flags: <defaults>
</compile_context>

<pallas_src>
import functools
import math

import jax
import jax.numpy as jnp
from jax import lax
from jax.experimental import pallas as pl
from jax.experimental.pallas import tpu as pltpu


# ----------------------------------------------------------------------------
# 1x1 conv: channel-major matmul, grid = (batch, pixel tiles).
# ----------------------------------------------------------------------------
def _conv1x1_kernel(w_ref, x_ref, o_ref):
    # w: (Cout, Cin); x: (1, Cin, tP); o: (1, Cout, tP)
    o_ref[0] = jnp.dot(w_ref[...], x_ref[0], preferred_element_type=jnp.float32)


def conv1x1(x, w, *, tile_p=512):
    """x: (N, Cin, H, W); w: (Cout, Cin); bias-free 1x1 conv -> (N, Cout, H, W)."""
    N, Cin, H, W = x.shape
    Cout = w.shape[0]
    P = H * W
    tP = P if P <= tile_p else tile_p          # tile_p is a multiple of 128
    xf = x.reshape(N, Cin, P)                  # contiguous reshape: no transpose
    yf = pl.pallas_call(
        _conv1x1_kernel,
        out_shape=jax.ShapeDtypeStruct((N, Cout, P), jnp.float32),
        grid=(N, pl.cdiv(P, tP)),
        in_specs=[pl.BlockSpec((Cout, Cin), lambda n, p: (0, 0)),
                  pl.BlockSpec((1, Cin, tP), lambda n, p: (n, 0, p))],
        out_specs=pl.BlockSpec((1, Cout, tP), lambda n, p: (n, 0, p)),
        compiler_params=pltpu.CompilerParams(
            dimension_semantics=("parallel", "parallel")),
    )(w, xf)
    return yf.reshape(N, Cout, H, W)


# ----------------------------------------------------------------------------
# Bilinear resize (align_corners=False), fused Ry @ x @ Rx^T per (n, c).
# ----------------------------------------------------------------------------
def _resize_matrix(out_size, in_size):
    """Interpolation matrix replicating F.interpolate(bilinear, align_corners=False)."""
    i = jnp.arange(out_size, dtype=jnp.float32)
    scale = in_size / out_size
    src = jnp.maximum(scale * (i + 0.5) - 0.5, 0.0)
    i0 = jnp.floor(src)
    lam = src - i0
    i0 = i0.astype(jnp.int32)
    i1 = jnp.minimum(i0 + 1, in_size - 1)
    cols = jnp.arange(in_size)
    m = ((cols[None, :] == i0[:, None]).astype(jnp.float32) * (1.0 - lam)[:, None]
         + (cols[None, :] == i1[:, None]).astype(jnp.float32) * lam[:, None])
    return m  # (out_size, in_size)


def _resize_kernel(ry_ref, rxT_ref, x_ref, o_ref):
    # ry: (Hout, Hin); rxT: (Win, Wout); x: (1, Hin, Win); o: (1, Hout, Wout)
    t = jnp.dot(ry_ref[...], x_ref[0], preferred_element_type=jnp.float32)
    o_ref[0] = jnp.dot(t, rxT_ref[...], preferred_element_type=jnp.float32)


def bilinear_resize(x, Hout, Wout):
    N, C, Hin, Win = x.shape
    Ry = _resize_matrix(Hout, Hin)            # (Hout, Hin)
    RxT = _resize_matrix(Wout, Win).T         # (Win, Wout)
    xf = x.reshape(N * C, Hin, Win)
    y = pl.pallas_call(
        _resize_kernel,
        out_shape=jax.ShapeDtypeStruct((N * C, Hout, Wout), jnp.float32),
        grid=(N * C,),
        in_specs=[pl.BlockSpec((Hout, Hin), lambda b: (0, 0)),
                  pl.BlockSpec((Win, Wout), lambda b: (0, 0)),
                  pl.BlockSpec((1, Hin, Win), lambda b: (b, 0, 0))],
        out_specs=pl.BlockSpec((1, Hout, Wout), lambda b: (b, 0, 0)),
        compiler_params=pltpu.CompilerParams(dimension_semantics=("parallel",)),
    )(Ry, RxT, xf)
    return y.reshape(N, C, Hout, Wout)


# ----------------------------------------------------------------------------
# Fused channel-concat + 3x3 conv (flow_make): in-kernel im2col via 9 shifted
# slices of the padded planes, accumulated in VMEM; concat never materialized.
# ----------------------------------------------------------------------------
def _flow_make_kernel(wh_ref, wl_ref, hp_ref, lp_ref, o_ref, *, H, W, Cm):
    # wh/wl: (9, 2, Cm) tap-major weights; hp/lp: (1, Cm, H+2, W+2); o: (1, 2, H*W)
    hp = hp_ref[0]
    lp = lp_ref[0]
    acc = jnp.zeros((2, H * W), jnp.float32)
    for dy in range(3):
        for dx in range(3):
            t = dy * 3 + dx
            hs = hp[:, dy:dy + H, dx:dx + W].reshape(Cm, H * W)
            ls = lp[:, dy:dy + H, dx:dx + W].reshape(Cm, H * W)
            acc = acc + jnp.dot(wh_ref[t], hs, preferred_element_type=jnp.float32)
            acc = acc + jnp.dot(wl_ref[t], ls, preferred_element_type=jnp.float32)
    o_ref[0] = acc


def flow_make(h_up, low_d, w_flow):
    """Equivalent to conv3x3(concat([h_up, low_d], 1), w_flow), padding=1, no bias."""
    N, Cm, H, W = h_up.shape
    hp = jnp.pad(h_up, ((0, 0), (0, 0), (1, 1), (1, 1)))
    lp = jnp.pad(low_d, ((0, 0), (0, 0), (1, 1), (1, 1)))
    wh = w_flow[:, :Cm].transpose(2, 3, 0, 1).reshape(9, 2, Cm)   # (dy,dx)-major
    wl = w_flow[:, Cm:].transpose(2, 3, 0, 1).reshape(9, 2, Cm)
    kernel = functools.partial(_flow_make_kernel, H=H, W=W, Cm=Cm)
    flow = pl.pallas_call(
        kernel,
        out_shape=jax.ShapeDtypeStruct((N, 2, H * W), jnp.float32),
        grid=(N,),
        in_specs=[pl.BlockSpec((9, 2, Cm), lambda n: (0, 0, 0)),
                  pl.BlockSpec((9, 2, Cm), lambda n: (0, 0, 0)),
                  pl.BlockSpec((1, Cm, H + 2, W + 2), lambda n: (n, 0, 0, 0)),
                  pl.BlockSpec((1, Cm, H + 2, W + 2), lambda n: (n, 0, 0, 0))],
        out_specs=pl.BlockSpec((1, 2, H * W), lambda n: (n, 0, 0)),
        compiler_params=pltpu.CompilerParams(dimension_semantics=("parallel",)),
    )(wh, wl, hp, lp)
    return flow.reshape(N, 2, H, W)


# ----------------------------------------------------------------------------
# flow_warp: grid_sample(bilinear, align_corners=True, zero padding) in a
# separable MXU-first formulation, tiled over output pixels.
# ----------------------------------------------------------------------------
def _warp_kernel(cx0_ref, cy0_ref, x_ref, flow_ref, o_ref, *, c, hin, win, bx, by):
    # cx0/cy0: (1, tS) base input-space coords; x: (1, C*Hin, Win);
    # flow: (1, 2, tS); o: (1, C, tS)
    tS = cx0_ref.shape[-1]
    f = flow_ref[0]                                   # (2, tS)
    ix = cx0_ref[...] + f[0:1, :] * bx                # (1, tS) input x coord
    iy = cy0_ref[...] + f[1:2, :] * by                # (1, tS) input y coord
    q = lax.broadcasted_iota(jnp.float32, (win, tS), 0)
    tx = jnp.maximum(0.0, 1.0 - jnp.abs(ix - q))      # (Win, tS) tent weights
    p = lax.broadcasted_iota(jnp.float32, (hin, tS), 0)
    ty = jnp.maximum(0.0, 1.0 - jnp.abs(iy - p))      # (Hin, tS)
    # Stage 1 (MXU): contract Win, contraction-major tx -> (C*Hin, tS)
    tmp = jnp.dot(x_ref[0], tx, preferred_element_type=jnp.float32)
    # Stage 2 (VPU): weighted sublane reduce over Hin -> (C, tS)
    tmp = tmp.reshape(c, hin, tS)
    o_ref[0] = jnp.sum(tmp * ty[None, :, :], axis=1)


def flow_warp(x, flow, *, tile_s=512):
    """x: (N, C, Hin, Win); flow: (N, 2, Hout, Wout) -> (N, C, Hout, Wout)."""
    N, C, Hin, Win = x.shape
    _, _, Hout, Wout = flow.shape
    S = Hout * Wout
    tS = S if S <= tile_s else tile_s                 # tile_s is a multiple of 128

    xf = x.reshape(N, C * Hin, Win)                   # contiguous: no transpose
    ff = flow.reshape(N, 2, S)

    # Fold base grid + flow normalization + align_corners=True mapping:
    #   ix = (gx + fx/Wout + 1) * (Win-1)/2 = cx0 + fx * bx   (lane-major consts)
    gx = jnp.linspace(-1.0, 1.0, Wout, dtype=jnp.float32)   # varies along W
    gy = jnp.linspace(-1.0, 1.0, Hout, dtype=jnp.float32)   # varies along H
    cx0 = jnp.tile((gx + 1.0) * (0.5 * (Win - 1)), Hout).reshape(1, S)
    cy0 = jnp.repeat((gy + 1.0) * (0.5 * (Hin - 1)), Wout).reshape(1, S)
    bx = float(0.5 * (Win - 1) / Wout)
    by = float(0.5 * (Hin - 1) / Hout)

    kernel = functools.partial(_warp_kernel, c=C, hin=Hin, win=Win, bx=bx, by=by)
    out = pl.pallas_call(
        kernel,
        out_shape=jax.ShapeDtypeStruct((N, C, S), jnp.float32),
        grid=(N, pl.cdiv(S, tS)),
        in_specs=[pl.BlockSpec((1, tS), lambda n, s: (0, s)),
                  pl.BlockSpec((1, tS), lambda n, s: (0, s)),
                  pl.BlockSpec((1, C * Hin, Win), lambda n, s: (n, 0, 0)),
                  pl.BlockSpec((1, 2, tS), lambda n, s: (n, 0, s))],
        out_specs=pl.BlockSpec((1, C, tS), lambda n, s: (n, 0, s)),
        compiler_params=pltpu.CompilerParams(
            dimension_semantics=("parallel", "parallel")),
    )(cx0, cy0, xf, ff)
    return out.reshape(N, C, Hout, Wout)


# ----------------------------------------------------------------------------
# AlignModule forward
# ----------------------------------------------------------------------------
def align_module_forward(params, low_feature, h_feature):
    N, Cin, H, W = low_feature.shape
    low_d = conv1x1(low_feature, params["w_down_l"])   # (N, Cout, H, W)
    h_d = conv1x1(h_feature, params["w_down_h"])       # (N, Cout, Hh, Wh)
    h_up = bilinear_resize(h_d, H, W)                  # (N, Cout, H, W)
    flow = flow_make(h_up, low_d, params["w_flow"])    # (N, 2, H, W)  (concat fused)
    out = flow_warp(h_feature, flow)                   # (N, Cin, H, W)
    return out


def init_params(key, inplane, outplane):
    k1, k2, k3 = jax.random.split(key, 3)
    w_down_h = jax.random.normal(k1, (outplane, inplane), jnp.float32) \
        * (1.0 / math.sqrt(inplane))
    w_down_l = jax.random.normal(k2, (outplane, inplane), jnp.float32) \
        * (1.0 / math.sqrt(inplane))
    w_flow = jax.random.normal(k3, (2, 2 * outplane, 3, 3), jnp.float32) \
        * (1.0 / math.sqrt(2 * outplane * 9))
    return {"w_down_h": w_down_h, "w_down_l": w_down_l, "w_flow": w_flow}


# ----------------------------------------------------------------------------
# Pure-JAX reference (mirrors the PyTorch module) for a correctness self-check.
# ----------------------------------------------------------------------------
def _ref_forward(params, low_feature, h_feature):
    def conv1(x, w):
        return jnp.einsum('oc,nchw->nohw', w, x)

    def resize(x, Hout, Wout):
        Ry = _resize_matrix(Hout, x.shape[2])
        Rx = _resize_matrix(Wout, x.shape[3])
        return jnp.einsum('oh,nchw,pw->ncop', Ry, x, Rx)

    def conv3(x, w):
        N, Cin, H, W = x.shape
        xp = jnp.pad(x, ((0, 0), (0, 0), (1, 1), (1, 1)))
        out = jnp.zeros((N, w.shape[0], H, W), jnp.float32)
        for dy in range(3):
            for dx in range(3):
                out = out + jnp.einsum('oc,nchw->nohw', w[:, :, dy, dx],
                                       xp[:, :, dy:dy + H, dx:dx + W])
        return out

    def warp(x, flow):
        N, C, Hin, Win = x.shape
        _, _, Hout, Wout = flow.shape
        gx = jnp.linspace(-1.0, 1.0, Wout, dtype=jnp.float32)[None, :]
        gy = jnp.linspace(-1.0, 1.0, Hout, dtype=jnp.float32)[:, None]
        ix = (gx + flow[:, 0] / Wout + 1.0) * 0.5 * (Win - 1)
        iy = (gy + flow[:, 1] / Hout + 1.0) * 0.5 * (Hin - 1)
        ix0 = jnp.floor(ix)
        iy0 = jnp.floor(iy)
        xr = x.reshape(N, C, Hin * Win)
        out = jnp.zeros((N, C, Hout, Wout), jnp.float32)
        for oy in (0, 1):
            for ox in (0, 1):
                px = ix0 + ox
                py = iy0 + oy
                wgt = (1.0 - jnp.abs(ix - px)) * (1.0 - jnp.abs(iy - py))
                valid = ((px >= 0) & (px <= Win - 1) &
                         (py >= 0) & (py <= Hin - 1)).astype(jnp.float32)
                idx = (jnp.clip(py, 0, Hin - 1) * Win
                       + jnp.clip(px, 0, Win - 1)).astype(jnp.int32)
                gathered = jnp.take_along_axis(
                    xr,
                    jnp.broadcast_to(idx.reshape(N, 1, Hout * Wout),
                                     (N, C, Hout * Wout)),
                    axis=2).reshape(N, C, Hout, Wout)
                out = out + (wgt * valid)[:, None] * gathered
        return out

    H, W = low_feature.shape[2:]
    low_d = conv1(low_feature, params["w_down_l"])
    h_d = conv1(h_feature, params["w_down_h"])
    h_up = resize(h_d, H, W)
    flow = conv3(jnp.concatenate([h_up, low_d], axis=1), params["w_flow"])
    return warp(h_feature, flow)


if __name__ == "__main__":
    inplane, outplane = 4, 8
    N, H, W = 2, 16, 16          # low_feature spatial
    Hh, Wh = 8, 8                # h_feature spatial (coarser)

    key = jax.random.PRNGKey(0)
    kp, kl, kh = jax.random.split(key, 3)
    params = init_params(kp, inplane, outplane)
    low_feature = jax.random.normal(kl, (N, inplane, H, W), jnp.float32)
    h_feature = jax.random.normal(kh, (N, inplane, Hh, Wh), jnp.float32)

    out = jax.block_until_ready(align_module_forward(params, low_feature, h_feature))

    assert out.shape == (N, inplane, H, W), out.shape
    assert bool(jnp.all(jnp.isfinite(out)))

    ref = jax.block_until_ready(_ref_forward(params, low_feature, h_feature))
    err = float(jnp.max(jnp.abs(out - ref)))
    assert err < 1e-3, f"mismatch vs pure-JAX reference: max abs err = {err}"

    print("KERNEL_OK")
</pallas_src>

<mosaic_0001>
module attributes {stable_mosaic.version = 11 : i64} {
  func.func @_conv1x1_kernel(%arg0: i32, %arg1: i32, %arg2: memref<8x4xf32, #tpu.memory_space<vmem>>, %arg3: memref<1x4x256xf32, #tpu.memory_space<vmem>>, %arg4: memref<1x8x256xf32, #tpu.memory_space<vmem>>) attributes {dimension_semantics = [#tpu.dimension_semantics<parallel>, #tpu.dimension_semantics<parallel>], iteration_bounds = array<i64: 2, 1>, scalar_prefetch = 0 : i64, scratch_operands = 0 : i64, tpu.core_type = #tpu.core_type<tc>, window_params = [{pipeline_mode = #tpu.pipeline_mode<synchronous>, transform_indices = @transform_0, window_bounds = array<i64: 8, 4>}, {transform_indices = @transform_1, window_bounds = array<i64: 1, 4, 256>}, {transform_indices = @transform_2, window_bounds = array<i64: 1, 8, 256>}]} {
    %c0 = arith.constant 0 : index
    %c0_0 = arith.constant 0 : index
    %0 = vector.load %arg2[%c0, %c0_0] : memref<8x4xf32, #tpu.memory_space<vmem>>, vector<8x4xf32>
    %c0_1 = arith.constant 0 : index
    %c0_2 = arith.constant 0 : index
    %c0_3 = arith.constant 0 : index
    %1 = vector.load %arg3[%c0_1, %c0_2, %c0_3] : memref<1x4x256xf32, #tpu.memory_space<vmem>>, vector<1x4x256xf32>
    %2 = vector.shape_cast %1 : vector<1x4x256xf32> to vector<4x256xf32>
    %cst = arith.constant dense<0.000000e+00> : vector<8x256xf32>
    %3 = tpu.matmul %0, %2, %cst {dimension_numbers = #tpu.dot_dimension_numbers<[1], [0], [0], [1], [0, 0, 1, 1], [], []>} : vector<8x4xf32>, vector<4x256xf32>, vector<8x256xf32> -> vector<8x256xf32>
    %c0_4 = arith.constant 0 : index
    %c0_5 = arith.constant 0 : index
    %c0_6 = arith.constant 0 : index
    %4 = vector.load %arg4[%c0_4, %c0_5, %c0_6] : memref<1x8x256xf32, #tpu.memory_space<vmem>>, vector<1x8x256xf32>
    %5 = vector.shape_cast %4 : vector<1x8x256xf32> to vector<8x256xf32>
    %6 = vector.shape_cast %3 : vector<8x256xf32> to vector<1x8x256xf32>
    tpu.vector_store %arg4[%c0_4, %c0_5, %c0_6], %6 {strides = array<i32>} : memref<1x8x256xf32, #tpu.memory_space<vmem>>, vector<1x8x256xf32>,
    return
  }
  func.func @transform_0(%arg0: i32, %arg1: i32) -> (i32, i32) {
    %c0_i32 = arith.constant 0 : i32
    %c0_i32_0 = arith.constant 0 : i32
    %c0_i32_1 = arith.constant 0 : i32
    return %c0_i32, %c0_i32_0 : i32, i32
  }
  func.func @transform_1(%arg0: i32, %arg1: i32) -> (i32, i32, i32) {
    %c0_i32 = arith.constant 0 : i32
    %c0_i32_0 = arith.constant 0 : i32
    return %arg0, %c0_i32, %arg1 : i32, i32, i32
  }
  func.func @transform_2(%arg0: i32, %arg1: i32) -> (i32, i32, i32) {
    %c0_i32 = arith.constant 0 : i32
    %c0_i32_0 = arith.constant 0 : i32
    return %arg0, %c0_i32, %arg1 : i32, i32, i32
  }
}

</mosaic_0001>

<llo_original>
// kernel: tpu_custom_call.1
$region0: #{tpu_custom_call.1}
  #allocation0 [shape = 'u32[]', space=smem, size = 0x4, offset = 0x4, fixed_abs, tag = 'smem constant byte address 0x4 - core index']
  #allocation1 [shape = 'u32[144,128]{1,0:T(1,128)}', space=vmem, size = 0x12000, scoped, tag = 'internal scratch']
  %s0 = inlined_call_operand.vmem [shape: f32[8,4], index: 0, kind: input, shape index: {}]
  %s1 = inlined_call_operand.hbm [shape: f32[2,4,256], index: 1, kind: input, shape index: {}]
  %s2 = inlined_call_operand.hbm [shape: f32[2,8,256], index: 2, kind: output, shape index: {}]
  %s3 = sld [smem:[#allocation0]]
  $region45: #{tpu_custom_call.1} parent=0
    _
  %s5 = ssub.s32 1, %s3
  %s6 = scalar_select 0, %s5, %s3
  $region1: #{tpu_custom_call.1} parent=0
    #allocation2 [shape = 'u8[8192]{0}', space=vmem, size = 0x2000, scoped, tag = 'input window, operand 1']
    #allocation3 [shape = 's32[2]{0}', space=sflag, size = 0x8, scoped, tag = 'scoped memory for tpu_custom_call.1']
    #allocation4 [shape = 's32[2]{0}', space=sflag, size = 0x8, scoped, tag = 'scoped memory for tpu_custom_call.1']
    #allocation5 [shape = 'u8[16384]{0}', space=vmem, size = 0x4000, scoped, tag = 'output window, operand 0']
    %7 = vsyncpa [#allocation3], 0
    %s8 = scalar_lea.sflag [#allocation3], 1
    %9 = vsyncpa %s8, 0
    %10 = vsyncpa [#allocation4], 0
    %s11 = scalar_lea.sflag [#allocation4], 1
    %12 = vsyncpa %s11, 0
    loop: start=0, step=1, limit=4
    $region2: #{tpu_custom_call.1} parent=1 // loop_pre_header
      _
    $region3: #{tpu_custom_call.1} parent=1 // loop_header
      %s14 = sphi 0, %s18
      %p15 = scmp.ge.s32.totalorder %s14, 4
      %s21 = sphi 0, %s33
      %s22 = sphi 0, %s29
      %s23 = sphi 0, %s21
      %s24 = sphi 0, %s22
      %s25 = sphi 0, %s23
      %s26 = sphi 0, %s24
      %s34 = sphi 0, %s34
      %s36 = sphi 0, %s34
      %s37 = sphi 0, %s36
      %s51 = sphi 0, %s37
      %s59 = sphi 0, %s61
      %s62 = sphi 0, %s59
      %s63 = sphi 0, %s62
      %s79 = sphi 0, %s63
      %s87 = sphi 0, %s89
      %s90 = sphi 0, %s87
      %s91 = sphi 0, %s90
      %s107 = sphi 0, %s91
    $region4: #{tpu_custom_call.1} parent=1 // loop_header_branch
      %17 = sbr.rel (%p15) target = $region8
    $region5: #{tpu_custom_call.1} parent=1 // loop_body
      %s19 = ssub.s32 %s14, 1
      %s20 = ssub.s32 %s14, 2
      %s27 = sadd.s32 1, %s22
      %p28 = scmp.ge.s32.totalorder %s27, 1
      %s29 = scalar_select %p28, 0, %s27
      %s30 = sadd.s32 1, %s21
      %s31 = scalar_select %p28, %s30, %s21
      %p32 = scmp.ge.s32.totalorder %s31, 2
      %s33 = scalar_select %p32, 0, %s31
      %s35 = sadd.s32 %s34, 1
      %p38 = scmp.eq.s32.totalorder %s14, 1
      %p39 = scmp.ne.s32.totalorder %s34, %s36
      %p40 = scmp.eq.s32.totalorder %s14, 0
      %p41 = por %p39, %p40
      %p42 = scmp.ne.s32.totalorder %s34, %s36
      %p43 = scmp.eq.s32.totalorder %s19, 1
      %p44 = por %p42, %p43
      %p45 = scmp.ne.s32.totalorder %s36, %s37
      %p46 = scmp.eq.s32.totalorder %s19, 0
      %p47 = por %p45, %p46
      %p48 = scmp.ne.s32.totalorder %s36, %s37
      %p49 = scmp.eq.s32.totalorder %s20, 1
      %p50 = por %p48, %p49
      %p52 = scmp.ne.s32.totalorder %s37, %s51
      %p53 = scmp.eq.s32.totalorder %s20, 0
      %p54 = por %p52, %p53
      %s55 = ssub.s32 %s21, %s33
      %s56 = ssub.s32 %s22, %s29
      %s57 = sor.u32 %s55, %s56
      %p58 = scmp.eq.s32.totalorder %s57, 0
      %s60 = sadd.s32 %s59, 1
      %s61 = scalar_select %p58, %s59, %s60
      %p64 = pneg %p58
      %p65 = scmp.eq.s32.totalorder %s14, 1
      %p66 = por %p64, %p65
      %p67 = scmp.ne.s32.totalorder %s59, %s62
      %p68 = scmp.eq.s32.totalorder %s14, 0
      %p69 = por %p67, %p68
      %p70 = scmp.ne.s32.totalorder %s59, %s62
      %p71 = scmp.eq.s32.totalorder %s19, 1
      %p72 = por %p70, %p71
      %p73 = scmp.ne.s32.totalorder %s62, %s63
      %p74 = scmp.eq.s32.totalorder %s19, 0
      %p75 = por %p73, %p74
      %p76 = scmp.ne.s32.totalorder %s62, %s63
      %p77 = scmp.eq.s32.totalorder %s20, 1
      %p78 = por %p76, %p77
      %p80 = scmp.ne.s32.totalorder %s63, %s79
      %p81 = scmp.eq.s32.totalorder %s20, 0
      %p82 = por %p80, %p81
      %s83 = ssub.s32 %s21, %s33
      %s84 = ssub.s32 %s22, %s29
      %s85 = sor.u32 %s83, %s84
      %p86 = scmp.eq.s32.totalorder %s85, 0
      %s88 = sadd.s32 %s87, 1
      %s89 = scalar_select %p86, %s87, %s88
      %p92 = pneg %p86
      %p93 = scmp.eq.s32.totalorder %s14, 1
      %p94 = por %p92, %p93
      %p95 = scmp.ne.s32.totalorder %s87, %s90
      %p96 = scmp.eq.s32.totalorder %s14, 0
      %p97 = por %p95, %p96
      %p98 = scmp.ne.s32.totalorder %s87, %s90
      %p99 = scmp.eq.s32.totalorder %s19, 1
      %p100 = por %p98, %p99
      %p101 = scmp.ne.s32.totalorder %s90, %s91
      %p102 = scmp.eq.s32.totalorder %s19, 0
      %p103 = por %p101, %p102
      %p104 = scmp.ne.s32.totalorder %s90, %s91
      %p105 = scmp.eq.s32.totalorder %s20, 1
      %p106 = por %p104, %p105
      %p108 = scmp.ne.s32.totalorder %s91, %s107
      %p109 = scmp.eq.s32.totalorder %s20, 0
      %p110 = por %p108, %p109
      %p111 = scmp.le.s32.totalorder 1, %s14
      %p112 = scmp.lt.s32.totalorder %s14, 3
      %p113 = pnand %p111, %p112
      %p114 = pneg %p113
      // Predicated region
      $region9: #{tpu_custom_call.1} parent=5 // pred_check
        _
      $region10: #{tpu_custom_call.1} parent=5 // pred_check_branch
        %116 = sbr.rel (%p113) target = $region12
      $region11: #{tpu_custom_call.1} parent=5 // pred_region
        %s117 = ssub.s32 %s14, 1
        // Predicated region
        $region13: #{tpu_custom_call.1} parent=11 // pred_check
          %p118 = pneg %p47
        $region14: #{tpu_custom_call.1} parent=11 // pred_check_branch
          %120 = sbr.rel (%p118) target = $region16
        $region15: #{tpu_custom_call.1} parent=11 // pred_region
          _
        $region16: #{tpu_custom_call.1} parent=11 // pred_fallthru
          _
      $region12: #{tpu_custom_call.1} parent=5 // pred_fallthru
        _
      %p121 = scmp.lt.s32.totalorder %s14, 2
      // Predicated region
      $region17: #{tpu_custom_call.1} parent=5 // pred_check
        %p122 = pneg %p121
      $region18: #{tpu_custom_call.1} parent=5 // pred_check_branch
        %124 = sbr.rel (%p122) target = $region20
      $region19: #{tpu_custom_call.1} parent=5 // pred_region
        // Predicated region
        $region21: #{tpu_custom_call.1} parent=19 // pred_check
          %p125 = pneg %p69
        $region22: #{tpu_custom_call.1} parent=19 // pred_check_branch
          %127 = sbr.rel (%p125) target = $region24
        $region23: #{tpu_custom_call.1} parent=19 // pred_region
          %s128 = sand.u32 %s59, 1
          %s129 = scalar_lea.sflag [#allocation3], %s128
          %s130 = sand.u32 %s59, 1
          %s131 = smul.addr %s130, 8
          %s132 = scalar_lea.vmem [#allocation2], %s131
          %s133 = smul.u32 2, %s22
          %s135 = ssub.s32 128, 128
          %136 = vsyncadd %s129, %s135
          %s137 = smul.addr %s21, 2
          %s138 = sadd.s32 %s133, %s137
          %s139 = smul.addr %s138, 64
          %s140 = scalar_lea.hbm %s1, %s139
          %s142 = sshll.u32 %s132, 4
          %s143 = int_to_ptr.vmem [resolvable:$true] %s142
          %145 = dma.hbm_to_vmem [thread:$0]  %s140, 128, %s143, %s129
        $region24: #{tpu_custom_call.1} parent=19 // pred_fallthru
          _
      $region20: #{tpu_custom_call.1} parent=5 // pred_fallthru
        _
      %p146 = scmp.le.s32.totalorder 1, %s14
      %p147 = scmp.lt.s32.totalorder %s14, 3
      %p148 = pnand %p146, %p147
      %p149 = pneg %p148
      // Predicated region
      $region25: #{tpu_custom_call.1} parent=5 // pred_check
        _
      $region26: #{tpu_custom_call.1} parent=5 // pred_check_branch
        %151 = sbr.rel (%p148) target = $region28
      $region27: #{tpu_custom_call.1} parent=5 // pred_region
        %s152 = ssub.s32 %s14, 1
        %s153 = sand.u32 %s62, 1
        %s154 = scalar_lea.sflag [#allocation3], %s153
        %s155 = sand.u32 %s62, 1
        %s156 = smul.addr %s155, 8
        %s157 = scalar_lea.vmem [#allocation2], %s156
        // Predicated region
        $region29: #{tpu_custom_call.1} parent=27 // pred_check
          %p158 = pneg %p75
        $region30: #{tpu_custom_call.1} parent=27 // pred_check_branch
          %160 = sbr.rel (%p158) target = $region32
        $region31: #{tpu_custom_call.1} parent=27 // pred_region
          %161 = dma.done %s154, 128
        $region32: #{tpu_custom_call.1} parent=27 // pred_fallthru
          _
        %p162 = pneg %p47
        %p163 = pneg %p44
        %s164 = sand.u32 %s62, 1
        %s165 = scalar_lea.sflag [#allocation3], %s164
        %s166 = sand.u32 %s62, 1
        %s167 = smul.addr %s166, 8
        %s168 = scalar_lea.vmem [#allocation2], %s167
        %p169 = pneg %p75
        %p170 = pneg %p72
        %p171 = pneg %p103
        %p172 = pneg %p100
        %s173 = sand.u32 %s90, 1
        %s174 = scalar_lea.sflag [#allocation4], %s173
        %s175 = sand.u32 %s90, 1
        %s176 = smul.addr %s175, 16
        %s177 = scalar_lea.vmem [#allocation5], %s176
        %s178 = smul.u32 2, %s24
        %s179 = smul.u32 2, %s24
        %v180 = vld [vmem:[%s0] sm:$0xff]
        %v181 = vld [vmem:[%s157] sm:$0xff]
        %v183 = vcombine.high %v181, %v181
        %vm184 = vcmask 31744
        %v186 = vsel %vm184, %v180, 0
        %vm188 = vcmask 1043456
        %v189 = vsel %vm188, %v181, 0
        %v191 = vsel %vm188, %v183, 0
        %193 = vmatprep.subr.mxu0 %v191
        %194 = vmatpush1.msra.mxu0 %v189
        %195 = vmatprep.subr.mxu0 0.0
        %196 = vmatpush1.msra.mxu0 0.0
        %197 = vmatprep.subr.mxu0 0.0
        %198 = vmatpush1.msra.mxu0 0.0
        %199 = vmatprep.subr.mxu0 0.0
        %200 = vmatpush1.msra.mxu0 0.0
        %201 = vmatprep.subr.mxu0 0.0
        %202 = vmatpush1.msra.mxu0 0.0
        %203 = vmatprep.subr.mxu0 0.0
        %204 = vmatpush1.msra.mxu0 0.0
        %205 = vmatprep.subr.mxu0 0.0
        %206 = vmatpush1.msra.mxu0 0.0
        %207 = vmatprep.subr.mxu0 0.0
        %208 = vmatpush1.msra.mxu0 0.0
        %209 = vmatprep.subr.mxu0 0.0
        %210 = vmatpush1.msra.mxu0 0.0
        %211 = vmatprep.subr.mxu0 0.0
        %212 = vmatpush1.msra.mxu0 0.0
        %213 = vmatprep.subr.mxu0 0.0
        %214 = vmatpush1.msra.mxu0 0.0
        %215 = vmatprep.subr.mxu0 0.0
        %216 = vmatpush1.msra.mxu0 0.0
        %217 = vmatprep.subr.mxu0 0.0
        %218 = vmatpush1.msra.mxu0 0.0
        %219 = vmatprep.subr.mxu0 0.0
        %220 = vmatpush1.msra.mxu0 0.0
        %221 = vmatprep.subr.mxu0 0.0
        %222 = vmatpush1.msra.mxu0 0.0
        %223 = vmatprep.subr.mxu0 0.0
        %224 = vmatpush1.msra.mxu0 0.0
        %225 = vmatprep.subr.mxu0 0.0
        %226 = vmatpush1.msra.mxu0 0.0
        %227 = vmatprep.subr.mxu0 0.0
        %228 = vmatpush1.msra.mxu0 0.0
        %229 = vmatprep.subr.mxu0 0.0
        %230 = vmatpush1.msra.mxu0 0.0
        %231 = vmatprep.subr.mxu0 0.0
        %232 = vmatpush1.msra.mxu0 0.0
        %233 = vmatprep.subr.mxu0 0.0
        %234 = vmatpush1.msra.mxu0 0.0
        %235 = vmatprep.subr.mxu0 0.0
        %236 = vmatpush1.msra.mxu0 0.0
        %237 = vmatprep.subr.mxu0 0.0
        %238 = vmatpush1.msra.mxu0 0.0
        %239 = vmatprep.subr.mxu0 0.0
        %240 = vmatpush1.msra.mxu0 0.0
        %241 = vmatprep.subr.mxu0 0.0
        %242 = vmatpush1.msra.mxu0 0.0
        %243 = vmatprep.subr.mxu0 0.0
        %244 = vmatpush1.msra.mxu0 0.0
        %245 = vmatprep.subr.mxu0 0.0
        %246 = vmatpush1.msra.mxu0 0.0
        %247 = vmatprep.subr.mxu0 0.0
        %248 = vmatpush1.msra.mxu0 0.0
        %249 = vmatprep.subr.mxu0 0.0
        %250 = vmatpush1.msra.mxu0 0.0
        %251 = vmatprep.subr.mxu0 0.0
        %252 = vmatpush1.msra.mxu0 0.0
        %253 = vmatprep.subr.mxu0 0.0
        %254 = vmatpush1.msra.mxu0 0.0
        %255 = vmatprep.subr.mxu0 0.0
        %256 = vmatpush1.msra.mxu0 0.0
        %257 = vmatprep.mubr.f32.mxu0 0.0
        %258 = vmatmul.mubr.f32.gmra.mrb[0].mxu0 %v186
        %v259 = vpop.f32.mrb[0].mxu0
        %v260 = vadd.f32 0.0, %v259
        %v261 = vpop.f32.mrb[0].mxu0
        %v262 = vadd.f32 0.0, %v261
        %263 = vdwg.mxu0
        %264 = vst [vmem:[%s177] sm:$0xff] %v260
        %265 = vst [vmem:[%s177 + $0x8] sm:$0xff] %v262
        %s266 = sand.u32 %s90, 1
        %s267 = scalar_lea.sflag [#allocation4], %s266
        %s268 = sand.u32 %s90, 1
        %s269 = smul.addr %s268, 16
        %s270 = scalar_lea.vmem [#allocation5], %s269
        // Predicated region
        $region33: #{tpu_custom_call.1} parent=27 // pred_check
          %p271 = pneg %p100
        $region34: #{tpu_custom_call.1} parent=27 // pred_check_branch
          %273 = sbr.rel (%p271) target = $region36
        $region35: #{tpu_custom_call.1} parent=27 // pred_region
          %s274 = smul.u32 2, %s24
          %s276 = ssub.s32 256, 256
          %277 = vsyncadd %s267, %s276
          %s278 = smul.addr %s23, 2
          %s279 = sadd.s32 %s274, %s278
          %s280 = smul.addr %s279, 128
          %s281 = scalar_lea.hbm %s2, %s280
          %s283 = sshll.u32 %s270, 4
          %s284 = int_to_ptr.vmem [resolvable:$true] %s283
          %286 = dma.vmem_to_hbm [thread:$0]  %s284, 256, %s281, %s267
        $region36: #{tpu_custom_call.1} parent=27 // pred_fallthru
          _
      $region28: #{tpu_custom_call.1} parent=5 // pred_fallthru
        _
      %p287 = scmp.le.s32.totalorder 2, %s14
      // Predicated region
      $region37: #{tpu_custom_call.1} parent=5 // pred_check
        %p288 = pneg %p287
      $region38: #{tpu_custom_call.1} parent=5 // pred_check_branch
        %290 = sbr.rel (%p288) target = $region40
      $region39: #{tpu_custom_call.1} parent=5 // pred_region
        %s291 = ssub.s32 %s14, 2
        // Predicated region
        $region41: #{tpu_custom_call.1} parent=39 // pred_check
          %p292 = pneg %p106
        $region42: #{tpu_custom_call.1} parent=39 // pred_check_branch
          %294 = sbr.rel (%p292) target = $region44
        $region43: #{tpu_custom_call.1} parent=39 // pred_region
          %s295 = sand.u32 %s91, 1
          %s296 = scalar_lea.sflag [#allocation4], %s295
          %s297 = sand.u32 %s91, 1
          %s298 = smul.addr %s297, 16
          %s299 = scalar_lea.vmem [#allocation5], %s298
          %300 = dma.done %s296, 256
        $region44: #{tpu_custom_call.1} parent=39 // pred_fallthru
          _
      $region40: #{tpu_custom_call.1} parent=5 // pred_fallthru
        _
    $region6: #{tpu_custom_call.1} parent=1 // loop_footer
      %s18 = sadd.s32 1, %s14
    $region7: #{tpu_custom_call.1} parent=1 // loop_footer_branch
      %13 = sbr.rel target = $region3
    $region8: #{tpu_custom_call.1} parent=1 // loop_exit
      _
    %301 = vsyncpa [#allocation3], 1
    %s302 = scalar_lea.sflag [#allocation3], 1
    %303 = vsyncpa %s302, 1
    %304 = vsyncpa [#allocation4], 1
    %s305 = scalar_lea.sflag [#allocation4], 1
    %306 = vsyncpa %s305, 1

</llo_original>
